<compile_context>
chip_gen: v5e
topology: v5e:2x2
jax: 0.10.0
libtpu: 0.0.40
codegen_flags: <defaults>
</compile_context>

<pallas_src>
import functools

import jax
import jax.numpy as jnp
from jax.experimental import pallas as pl
from jax.experimental.pallas import tpu as pltpu

LANE = 128


def _round_up(n, m):
    return ((n + m - 1) // m) * m


def actor_kernel(x_ref, w1_ref, b1_ref, w2_ref, b2_ref, w3_ref, b3_ref, o_ref,
                 *, batch):
    # x_ref: (M, S) f32, M = t_blk * batch.  Weights: bf16, lane-dense padded.
    # Biases: (1, H) f32.  o_ref: (M, A_p) f32.
    x = x_ref[...].astype(jnp.bfloat16)

    # fc1 + ReLU  (bf16 operands, f32 accumulation)
    h1 = jnp.dot(x, w1_ref[...], preferred_element_type=jnp.float32) + b1_ref[...]
    h1 = jnp.maximum(h1, 0.0)

    # fc2 + ReLU
    h2 = jnp.dot(h1.astype(jnp.bfloat16), w2_ref[...],
                 preferred_element_type=jnp.float32) + b2_ref[...]
    h2 = jnp.maximum(h2, 0.0)

    # fc3 + tanh
    logits = jnp.dot(h2.astype(jnp.bfloat16), w3_ref[...],
                     preferred_element_type=jnp.float32) + b3_ref[...]
    logits = jnp.tanh(logits)

    # softmax over dim=0 (the per-step batch axis), matching F.softmax(out, dim=0).
    # Reductions are over the B axis of the (t_blk, B, A_p) view — never over
    # the fused t_blk*B axis.  Exact divide (kernel is nowhere near EUP-bound).
    m_rows, a_p = logits.shape
    t_blk = m_rows // batch
    l3 = logits.reshape(t_blk, batch, a_p)
    mx = jnp.max(l3, axis=1, keepdims=True)
    e = jnp.exp(l3 - mx)
    s = jnp.sum(e, axis=1, keepdims=True)
    o_ref[...] = (e / s).reshape(m_rows, a_p)


def prepare_params(params):
    """Pad parameters to lane-dense widths and cast matmul weights to bf16.

    Call ONCE (outside the hot path) and reuse the result for every forward.
    Zero-padding is mathematically exact; padded action columns are sliced off
    by the wrapper.
    """
    w1, b1, w2, b2, w3, b3 = params
    H1 = w1.shape[1]
    H2, A = w3.shape
    H1_p = _round_up(H1, LANE)
    H2_p = _round_up(H2, LANE)
    A_p = _round_up(A, LANE)
    # Note: w1's input (K) dim stays at the true num_states — x is NOT padded.
    w1_p = jnp.pad(w1, ((0, 0), (0, H1_p - H1))).astype(jnp.bfloat16)
    b1_p = jnp.pad(b1, ((0, 0), (0, H1_p - H1)))
    w2_p = jnp.pad(w2, ((0, H1_p - H1), (0, H2_p - H2))).astype(jnp.bfloat16)
    b2_p = jnp.pad(b2, ((0, 0), (0, H2_p - H2)))
    w3_p = jnp.pad(w3, ((0, H2_p - H2), (0, A_p - A))).astype(jnp.bfloat16)
    b3_p = jnp.pad(b3, ((0, 0), (0, A_p - A)))
    return (w1_p, b1_p, w2_p, b2_p, w3_p, b3_p)


def actor_forward(x, prepared, num_actions):
    """x: (B, num_states) for one forward pass, or (T, B, num_states) for T
    independent forward passes fused into one pallas_call.  `prepared` comes
    from prepare_params()."""
    w1, b1, w2, b2, w3, b3 = prepared
    squeeze = x.ndim == 2
    if squeeze:
        x = x[None]
    T, B, S = x.shape
    A_p = w3.shape[1]

    # Collapse T into the block so the matmuls run on a (t_blk*B, S) slab.
    # Target ~256 rows per block (fills a 256-wide MXU pass on v6e/v7x); for
    # small T this degenerates to a single grid step.
    t_blk = min(T, max(1, 256 // max(B, 1)))
    if (T % t_blk) or ((t_blk * B) % 8 != 0 and t_blk != T):
        t_blk = T  # block == full array is always legal
    n_blocks = T // t_blk
    m_blk = t_blk * B

    x2 = x.reshape(T * B, S)  # true (unpadded) feature width

    grid_spec = pltpu.PrefetchScalarGridSpec(
        num_scalar_prefetch=0,
        grid=(n_blocks,),
        in_specs=[
            # per-block input slab
            pl.BlockSpec((m_blk, S), lambda i: (i, 0)),
            # weights/biases: constant block index -> resident in VMEM
            pl.BlockSpec(w1.shape, lambda i: (0, 0)),
            pl.BlockSpec(b1.shape, lambda i: (0, 0)),
            pl.BlockSpec(w2.shape, lambda i: (0, 0)),
            pl.BlockSpec(b2.shape, lambda i: (0, 0)),
            pl.BlockSpec(w3.shape, lambda i: (0, 0)),
            pl.BlockSpec(b3.shape, lambda i: (0, 0)),
        ],
        out_specs=pl.BlockSpec((m_blk, A_p), lambda i: (i, 0)),
    )

    out = pl.pallas_call(
        functools.partial(actor_kernel, batch=B),
        out_shape=jax.ShapeDtypeStruct((T * B, A_p), jnp.float32),
        grid_spec=grid_spec,
        compiler_params=pltpu.CompilerParams(
            # us-scale, overhead-bound kernel: don't split tiny grids across
            # v7x's two TensorCores.
            dimension_semantics=("arbitrary",),
        ),
    )(x2, w1, b1, w2, b2, w3, b3)

    # TODO(synk): consumers could read the padded (…, A_p) buffer directly to
    # avoid this small wrapper slice.
    out = out.reshape(T, B, A_p)[:, :, :num_actions]
    return out[0] if squeeze else out


def init_actor_params(key, num_states, num_actions, latent_factor=2, init_w=0.003):
    """Deterministic init mirroring the PyTorch module's shapes.
    Weights stored as (in_features, out_features) so the kernel computes x @ W + b."""
    hidden1 = num_states * latent_factor * 4
    hidden2 = num_states * latent_factor * 3
    ks = jax.random.split(key, 6)

    def uni(k, shape, bound):
        return jax.random.uniform(k, shape, jnp.float32, -bound, bound)

    w1 = uni(ks[0], (num_states, hidden1), 1.0 / jnp.sqrt(float(num_states)))
    b1 = uni(ks[1], (1, hidden1), 1.0 / jnp.sqrt(float(num_states)))
    w2 = uni(ks[2], (hidden1, hidden2), 1.0 / jnp.sqrt(float(hidden1)))
    b2 = uni(ks[3], (1, hidden2), 1.0 / jnp.sqrt(float(hidden1)))
    w3 = uni(ks[4], (hidden2, num_actions), init_w)
    b3 = uni(ks[5], (1, num_actions), init_w)
    return (w1, b1, w2, b2, w3, b3)


def actor_forward_ref(x, params):
    """Pure-JAX reference with the same numerics (bf16 matmul operands,
    f32 accumulation, f32 elementwise / softmax over the batch axis)."""
    w1, b1, w2, b2, w3, b3 = params

    def mm(a, w):
        return jnp.dot(a.astype(jnp.bfloat16), w.astype(jnp.bfloat16),
                       preferred_element_type=jnp.float32)

    h1 = jnp.maximum(mm(x, w1) + b1, 0.0)
    h2 = jnp.maximum(mm(h1, w2) + b2, 0.0)
    logits = jnp.tanh(mm(h2, w3) + b3)
    return jax.nn.softmax(logits, axis=-2)  # PyTorch F.softmax(out, dim=0)


if __name__ == "__main__":
    key = jax.random.PRNGKey(0)
    k_param, k_x = jax.random.split(key)

    batch = 2
    num_states = 16
    num_actions = 8   # hidden1 = 128, hidden2 = 96 (padded to 128 in prepare_params)
    steps = 8         # 8 independent forward passes fused into ONE grid step

    params = init_actor_params(k_param, num_states, num_actions)
    prepared = prepare_params(params)          # pad/cast once, off the hot path
    xs = jax.random.normal(k_x, (steps, batch, num_states), jnp.float32)

    # Fused path: one pallas_call, one grid step, (steps*batch, S) matmul slab.
    out = actor_forward(xs, prepared, num_actions)
    jax.block_until_ready(out)
    ref = actor_forward_ref(xs, params)
    assert out.shape == (steps, batch, num_actions)
    assert jnp.allclose(out, ref, atol=2e-3, rtol=2e-3)

    # Single forward pass (matches the PyTorch Actor(x) call signature).
    out1 = actor_forward(xs[0], prepared, num_actions)
    jax.block_until_ready(out1)
    ref1 = actor_forward_ref(xs[0], params)
    assert out1.shape == (batch, num_actions)
    assert jnp.allclose(out1, ref1, atol=2e-3, rtol=2e-3)

    print("KERNEL_OK")
</pallas_src>

<mosaic_0001>
module attributes {stable_mosaic.version = 11 : i64} {
  func.func @actor_kernel(%arg0: i32, %arg1: memref<16x16xf32, #tpu.memory_space<vmem>>, %arg2: memref<16x128xbf16, #tpu.memory_space<vmem>>, %arg3: memref<1x128xf32, #tpu.memory_space<vmem>>, %arg4: memref<128x128xbf16, #tpu.memory_space<vmem>>, %arg5: memref<1x128xf32, #tpu.memory_space<vmem>>, %arg6: memref<128x128xbf16, #tpu.memory_space<vmem>>, %arg7: memref<1x128xf32, #tpu.memory_space<vmem>>, %arg8: memref<16x128xf32, #tpu.memory_space<vmem>>) attributes {dimension_semantics = [#tpu.dimension_semantics<arbitrary>], iteration_bounds = array<i64: 1>, scalar_prefetch = 0 : i64, scratch_operands = 0 : i64, tpu.core_type = #tpu.core_type<tc>, window_params = [{transform_indices = @transform_0, window_bounds = array<i64: 16, 16>}, {pipeline_mode = #tpu.pipeline_mode<synchronous>, transform_indices = @transform_1, window_bounds = array<i64: 16, 128>}, {pipeline_mode = #tpu.pipeline_mode<synchronous>, transform_indices = @transform_2, window_bounds = array<i64: 1, 128>}, {pipeline_mode = #tpu.pipeline_mode<synchronous>, transform_indices = @transform_3, window_bounds = array<i64: 128, 128>}, {pipeline_mode = #tpu.pipeline_mode<synchronous>, transform_indices = @transform_4, window_bounds = array<i64: 1, 128>}, {pipeline_mode = #tpu.pipeline_mode<synchronous>, transform_indices = @transform_5, window_bounds = array<i64: 128, 128>}, {pipeline_mode = #tpu.pipeline_mode<synchronous>, transform_indices = @transform_6, window_bounds = array<i64: 1, 128>}, {transform_indices = @transform_7, window_bounds = array<i64: 16, 128>}]} {
    %c0 = arith.constant 0 : index
    %c0_0 = arith.constant 0 : index
    %0 = vector.load %arg1[%c0, %c0_0] : memref<16x16xf32, #tpu.memory_space<vmem>>, vector<16x16xf32>
    %1 = arith.truncf %0 : vector<16x16xf32> to vector<16x16xbf16>
    %c0_1 = arith.constant 0 : index
    %c0_2 = arith.constant 0 : index
    %2 = vector.load %arg2[%c0_1, %c0_2] : memref<16x128xbf16, #tpu.memory_space<vmem>>, vector<16x128xbf16>
    %cst = arith.constant dense<0.000000e+00> : vector<16x128xf32>
    %3 = tpu.matmul %1, %2, %cst {dimension_numbers = #tpu.dot_dimension_numbers<[1], [0], [0], [1], [0, 0, 1, 1], [], []>} : vector<16x16xbf16>, vector<16x128xbf16>, vector<16x128xf32> -> vector<16x128xf32>
    %c0_3 = arith.constant 0 : index
    %c0_4 = arith.constant 0 : index
    %4 = vector.load %arg3[%c0_3, %c0_4] : memref<1x128xf32, #tpu.memory_space<vmem>>, vector<1x128xf32>
    %5 = vector.broadcast %4 : vector<1x128xf32> to vector<16x128xf32>
    %6 = arith.addf %3, %5 : vector<16x128xf32>
    %cst_5 = arith.constant 0.000000e+00 : f32
    %7 = vector.broadcast %cst_5 : f32 to vector<16x128xf32>
    %8 = arith.maximumf %6, %7 : vector<16x128xf32>
    %9 = arith.truncf %8 : vector<16x128xf32> to vector<16x128xbf16>
    %c0_6 = arith.constant 0 : index
    %c0_7 = arith.constant 0 : index
    %10 = vector.load %arg4[%c0_6, %c0_7] : memref<128x128xbf16, #tpu.memory_space<vmem>>, vector<128x128xbf16>
    %cst_8 = arith.constant dense<0.000000e+00> : vector<16x128xf32>
    %11 = tpu.matmul %9, %10, %cst_8 {dimension_numbers = #tpu.dot_dimension_numbers<[1], [0], [0], [1], [0, 0, 1, 1], [], []>} : vector<16x128xbf16>, vector<128x128xbf16>, vector<16x128xf32> -> vector<16x128xf32>
    %c0_9 = arith.constant 0 : index
    %c0_10 = arith.constant 0 : index
    %12 = vector.load %arg5[%c0_9, %c0_10] : memref<1x128xf32, #tpu.memory_space<vmem>>, vector<1x128xf32>
    %13 = vector.broadcast %12 : vector<1x128xf32> to vector<16x128xf32>
    %14 = arith.addf %11, %13 : vector<16x128xf32>
    %cst_11 = arith.constant 0.000000e+00 : f32
    %15 = vector.broadcast %cst_11 : f32 to vector<16x128xf32>
    %16 = arith.maximumf %14, %15 : vector<16x128xf32>
    %17 = arith.truncf %16 : vector<16x128xf32> to vector<16x128xbf16>
    %c0_12 = arith.constant 0 : index
    %c0_13 = arith.constant 0 : index
    %18 = vector.load %arg6[%c0_12, %c0_13] : memref<128x128xbf16, #tpu.memory_space<vmem>>, vector<128x128xbf16>
    %cst_14 = arith.constant dense<0.000000e+00> : vector<16x128xf32>
    %19 = tpu.matmul %17, %18, %cst_14 {dimension_numbers = #tpu.dot_dimension_numbers<[1], [0], [0], [1], [0, 0, 1, 1], [], []>} : vector<16x128xbf16>, vector<128x128xbf16>, vector<16x128xf32> -> vector<16x128xf32>
    %c0_15 = arith.constant 0 : index
    %c0_16 = arith.constant 0 : index
    %20 = vector.load %arg7[%c0_15, %c0_16] : memref<1x128xf32, #tpu.memory_space<vmem>>, vector<1x128xf32>
    %21 = vector.broadcast %20 : vector<1x128xf32> to vector<16x128xf32>
    %22 = arith.addf %19, %21 : vector<16x128xf32>
    %23 = math.tanh %22 : vector<16x128xf32>
    %24 = vector.shape_cast %23 : vector<16x128xf32> to vector<8x2x128xf32>
    %cst_17 = arith.constant dense<0xFF800000> : vector<8x128xf32>
    %25 = vector.multi_reduction <maximumf>, %24, %cst_17 [1] : vector<8x2x128xf32> to vector<8x128xf32>
    %26 = vector.shape_cast %25 : vector<8x128xf32> to vector<8x1x128xf32>
    %27 = vector.broadcast %26 : vector<8x1x128xf32> to vector<8x2x128xf32>
    %28 = arith.subf %24, %27 : vector<8x2x128xf32>
    %29 = math.exp %28 : vector<8x2x128xf32>
    %cst_18 = arith.constant dense<0.000000e+00> : vector<8x128xf32>
    %30 = vector.multi_reduction <add>, %29, %cst_18 [1] : vector<8x2x128xf32> to vector<8x128xf32>
    %31 = vector.shape_cast %30 : vector<8x128xf32> to vector<8x1x128xf32>
    %32 = vector.broadcast %31 : vector<8x1x128xf32> to vector<8x2x128xf32>
    %33 = arith.divf %29, %32 : vector<8x2x128xf32>
    %34 = vector.shape_cast %33 : vector<8x2x128xf32> to vector<16x128xf32>
    %c0_19 = arith.constant 0 : index
    %c0_20 = arith.constant 0 : index
    %35 = vector.load %arg8[%c0_19, %c0_20] : memref<16x128xf32, #tpu.memory_space<vmem>>, vector<16x128xf32>
    tpu.vector_store %arg8[%c0_19, %c0_20], %34 {strides = array<i32>} : memref<16x128xf32, #tpu.memory_space<vmem>>, vector<16x128xf32>,
    return
  }
  func.func @transform_0(%arg0: i32) -> (i32, i32) {
    %c0_i32 = arith.constant 0 : i32
    %c0_i32_0 = arith.constant 0 : i32
    return %arg0, %c0_i32 : i32, i32
  }
  func.func @transform_1(%arg0: i32) -> (i32, i32) {
    %c0_i32 = arith.constant 0 : i32
    %c0_i32_0 = arith.constant 0 : i32
    %c0_i32_1 = arith.constant 0 : i32
    return %c0_i32, %c0_i32_0 : i32, i32
  }
  func.func @transform_2(%arg0: i32) -> (i32, i32) {
    %c0_i32 = arith.constant 0 : i32
    %c0_i32_0 = arith.constant 0 : i32
    %c0_i32_1 = arith.constant 0 : i32
    return %c0_i32, %c0_i32_0 : i32, i32
  }
  func.func @transform_3(%arg0: i32) -> (i32, i32) {
    %c0_i32 = arith.constant 0 : i32
    %c0_i32_0 = arith.constant 0 : i32
    %c0_i32_1 = arith.constant 0 : i32
    return %c0_i32, %c0_i32_0 : i32, i32
  }
  func.func @transform_4(%arg0: i32) -> (i32, i32) {
    %c0_i32 = arith.constant 0 : i32
    %c0_i32_0 = arith.constant 0 : i32
    %c0_i32_1 = arith.constant 0 : i32
    return %c0_i32, %c0_i32_0 : i32, i32
  }
  func.func @transform_5(%arg0: i32) -> (i32, i32) {
    %c0_i32 = arith.constant 0 : i32
    %c0_i32_0 = arith.constant 0 : i32
    %c0_i32_1 = arith.constant 0 : i32
    return %c0_i32, %c0_i32_0 : i32, i32
  }
  func.func @transform_6(%arg0: i32) -> (i32, i32) {
    %c0_i32 = arith.constant 0 : i32
    %c0_i32_0 = arith.constant 0 : i32
    %c0_i32_1 = arith.constant 0 : i32
    return %c0_i32, %c0_i32_0 : i32, i32
  }
  func.func @transform_7(%arg0: i32) -> (i32, i32) {
    %c0_i32 = arith.constant 0 : i32
    %c0_i32_0 = arith.constant 0 : i32
    return %arg0, %c0_i32 : i32, i32
  }
}

</mosaic_0001>

<llo_original>
// kernel: tpu_custom_call.1
$region0: #{tpu_custom_call.1}
  #allocation0 [shape = 'u32[]', space=smem, size = 0x4, offset = 0x4, fixed_abs, tag = 'smem constant byte address 0x4 - core index']
  #allocation1 [shape = 'u32[72,128]{1,0:T(1,128)}', space=vmem, size = 0x9000, scoped, tag = 'internal scratch']
  %s0 = inlined_call_operand.hbm [shape: f32[16,16], index: 0, kind: input, shape index: {}]
  %s1 = inlined_call_operand.hbm [shape: bf16[16,128], index: 1, kind: input, shape index: {}]
  %s2 = inlined_call_operand.vmem [shape: f32[1,128], index: 2, kind: input, shape index: {}]
  %s3 = inlined_call_operand.hbm [shape: bf16[128,128], index: 3, kind: input, shape index: {}]
  %s4 = inlined_call_operand.vmem [shape: f32[1,128], index: 4, kind: input, shape index: {}]
  %s5 = inlined_call_operand.hbm [shape: bf16[128,128], index: 5, kind: input, shape index: {}]
  %s6 = inlined_call_operand.vmem [shape: f32[1,128], index: 6, kind: input, shape index: {}]
  %s7 = inlined_call_operand.hbm [shape: f32[16,128], index: 7, kind: output, shape index: {}]
  %s8 = sld [smem:[#allocation0]]
  $region54: #{tpu_custom_call.1} parent=0
    _
  %s10 = ssub.s32 1, %s8
  %s11 = scalar_select 0, %s10, %s8
  $region1: #{tpu_custom_call.1} parent=0
    #allocation2 [shape = 'u8[8192]{0}', space=vmem, size = 0x2000, scoped, tag = 'input window, operand 0, single buffered']
    #allocation3 [shape = 's32[1]{0}', space=sflag, size = 0x4, scoped, tag = 'scoped memory for tpu_custom_call.1']
    #allocation4 [shape = 's32[1]{0}', space=sflag, size = 0x4, scoped, tag = 'scoped memory for tpu_custom_call.1']
    #allocation5 [shape = 'u8[4096]{0}', space=vmem, size = 0x1000, scoped, tag = 'input window, operand 1, single buffered']
    #allocation6 [shape = 's32[1]{0}', space=sflag, size = 0x4, scoped, tag = 'scoped memory for tpu_custom_call.1']
    #allocation7 [shape = 'u8[32768]{0}', space=vmem, size = 0x8000, scoped, tag = 'input window, operand 3, single buffered']
    #allocation8 [shape = 'u8[32768]{0}', space=vmem, size = 0x8000, scoped, tag = 'input window, operand 5, single buffered']
    #allocation9 [shape = 's32[1]{0}', space=sflag, size = 0x4, scoped, tag = 'scoped memory for tpu_custom_call.1']
    #allocation10 [shape = 'u8[8192]{0}', space=vmem, size = 0x2000, scoped, tag = 'output window, operand 0, single buffered']
    %12 = vsyncpa [#allocation3], 0
    %13 = vsyncpa [#allocation6], 0
    %14 = vsyncpa [#allocation9], 0
    %15 = vsyncpa [#allocation4], 0
    // Predicated region
    $region2: #{tpu_custom_call.1} parent=1 // pred_check
      _
    $region3: #{tpu_custom_call.1} parent=1 // pred_check_branch
      %17 = sbr.rel (0) target = $region5
    $region4: #{tpu_custom_call.1} parent=1 // pred_region
      %19 = vsyncadd [#allocation3], 0
      %s20 = sshll.u32 %s0, 4
      %s21 = int_to_ptr.hbm [resolvable:$true] %s20
      %s22 = sshll.u32 [#allocation2], 4
      %s23 = int_to_ptr.vmem [resolvable:$true] %s22
      %28 = dma.hbm_to_vmem [thread:$0]  %s21, 256, %s23, [#allocation3], 128, 128, 8
    $region5: #{tpu_custom_call.1} parent=1 // pred_fallthru
      _
    // Predicated region
    $region6: #{tpu_custom_call.1} parent=1 // pred_check
      _
    $region7: #{tpu_custom_call.1} parent=1 // pred_check_branch
      %30 = sbr.rel (0) target = $region9
    $region8: #{tpu_custom_call.1} parent=1 // pred_region
      %32 = vsyncadd [#allocation6], 0
      %s33 = sshll.u32 %s1, 4
      %s34 = int_to_ptr.hbm [resolvable:$true] %s33
      %s35 = sshll.u32 [#allocation5], 4
      %s36 = int_to_ptr.vmem [resolvable:$true] %s35
      %41 = dma.hbm_to_vmem [thread:$0]  %s34, 128, %s36, [#allocation6], 64, 64, 4
    $region9: #{tpu_custom_call.1} parent=1 // pred_fallthru
      _
    // Predicated region
    $region10: #{tpu_custom_call.1} parent=1 // pred_check
      _
    $region11: #{tpu_custom_call.1} parent=1 // pred_check_branch
      %43 = sbr.rel (0) target = $region13
    $region12: #{tpu_custom_call.1} parent=1 // pred_region
      _
    $region13: #{tpu_custom_call.1} parent=1 // pred_fallthru
      _
    // Predicated region
    $region14: #{tpu_custom_call.1} parent=1 // pred_check
      _
    $region15: #{tpu_custom_call.1} parent=1 // pred_check_branch
      %45 = sbr.rel (0) target = $region17
    $region16: #{tpu_custom_call.1} parent=1 // pred_region
      %47 = vsyncadd [#allocation6], 0
      %s48 = sshll.u32 %s3, 4
      %s49 = int_to_ptr.hbm [resolvable:$true] %s48
      %s50 = sshll.u32 [#allocation7], 4
      %s51 = int_to_ptr.vmem [resolvable:$true] %s50
      %56 = dma.hbm_to_vmem [thread:$0]  %s49, 1024, %s51, [#allocation6], 64, 64, 4
    $region17: #{tpu_custom_call.1} parent=1 // pred_fallthru
      _
    // Predicated region
    $region18: #{tpu_custom_call.1} parent=1 // pred_check
      _
    $region19: #{tpu_custom_call.1} parent=1 // pred_check_branch
      %58 = sbr.rel (0) target = $region21
    $region20: #{tpu_custom_call.1} parent=1 // pred_region
      _
    $region21: #{tpu_custom_call.1} parent=1 // pred_fallthru
      _
    // Predicated region
    $region22: #{tpu_custom_call.1} parent=1 // pred_check
      _
    $region23: #{tpu_custom_call.1} parent=1 // pred_check_branch
      %60 = sbr.rel (0) target = $region25
    $region24: #{tpu_custom_call.1} parent=1 // pred_region
      %62 = vsyncadd [#allocation9], 0
      %s63 = sshll.u32 %s5, 4
      %s64 = int_to_ptr.hbm [resolvable:$true] %s63
      %s65 = sshll.u32 [#allocation8], 4
      %s66 = int_to_ptr.vmem [resolvable:$true] %s65
      %71 = dma.hbm_to_vmem [thread:$0]  %s64, 1024, %s66, [#allocation9], 64, 64, 4
    $region25: #{tpu_custom_call.1} parent=1 // pred_fallthru
      _
    // Predicated region
    $region26: #{tpu_custom_call.1} parent=1 // pred_check
      _
    $region27: #{tpu_custom_call.1} parent=1 // pred_check_branch
      %73 = sbr.rel (0) target = $region29
    $region28: #{tpu_custom_call.1} parent=1 // pred_region
      _
    $region29: #{tpu_custom_call.1} parent=1 // pred_fallthru
      _
    // Predicated region
    $region30: #{tpu_custom_call.1} parent=1 // pred_check
      _
    $region31: #{tpu_custom_call.1} parent=1 // pred_check_branch
      %75 = sbr.rel (0) target = $region33
    $region32: #{tpu_custom_call.1} parent=1 // pred_region
      %77 = dma.done [#allocation3], 256
    $region33: #{tpu_custom_call.1} parent=1 // pred_fallthru
      _
    // Predicated region
    $region34: #{tpu_custom_call.1} parent=1 // pred_check
      _
    $region35: #{tpu_custom_call.1} parent=1 // pred_check_branch
      %79 = sbr.rel (0) target = $region37
    $region36: #{tpu_custom_call.1} parent=1 // pred_region
      %81 = dma.done [#allocation6], 128
    $region37: #{tpu_custom_call.1} parent=1 // pred_fallthru
      _
    // Predicated region
    $region38: #{tpu_custom_call.1} parent=1 // pred_check
      _
    $region39: #{tpu_custom_call.1} parent=1 // pred_check_branch
      %83 = sbr.rel (0) target = $region41
    $region40: #{tpu_custom_call.1} parent=1 // pred_region
      %85 = dma.done [#allocation6], 1024
    $region41: #{tpu_custom_call.1} parent=1 // pred_fallthru
      _
    // Predicated region
    $region42: #{tpu_custom_call.1} parent=1 // pred_check
      _
    $region43: #{tpu_custom_call.1} parent=1 // pred_check_branch
      %87 = sbr.rel (0) target = $region45
    $region44: #{tpu_custom_call.1} parent=1 // pred_region
      %89 = dma.done [#allocation9], 1024
    $region45: #{tpu_custom_call.1} parent=1 // pred_fallthru
      _
    %v91 = vld [vmem:[#allocation2] sm:$0xff]
    %v92 = vld [vmem:[#allocation2 + $0x8] sm:$0xff]
    %v93 = vpack.c.bf16 %v92, %v91
    %v94 = vld [vmem:[#allocation5] sm:$0xf]
    %v95 = vld [vmem:[#allocation5 + $0x4] sm:$0xf]
    %v96 = vld [vmem:[%s2] sm:$0x1]
    %v98 = vperm.slane %v96, 0
    %v102 = vunpack.c.l.b16 %v94
    %v103 = vunpack.c.l.b16 %v95
    %v104 = vpack.c.b16 %v103, %v102
    %vm106 = vcmask 130048
    %v108 = vsel %vm106, %v93, 0
    %110 = vmatpush.bf16.msra.mxu0 0
    %111 = vmatpush.bf16.msra.mxu0 0
    %112 = vmatpush.bf16.msra.mxu0 0
    %113 = vmatpush.bf16.msra.mxu0 0
    %114 = vmatpush.bf16.msra.mxu0 0
    %115 = vmatpush.bf16.msra.mxu0 0
    %116 = vmatpush.bf16.msra.mxu0 0
    %117 = vmatpush.bf16.msra.mxu0 %v104
    %118 = vmatmul.bf16.gmra.mxu0 %v108
    %v119 = vpop.f32.mrf.mxu0
    %v120 = vadd.f32 %v98, %v119
    %v121 = vpop.f32.mrf.mxu0
    %v122 = vadd.f32 %v98, %v121
    %123 = vdwg.mxu0
    %v124 = vmax.f32 %v120, 0.0
    %v125 = vmax.f32 %v122, 0.0
    %v126 = vpack.c.bf16 %v125, %v124
    %v127 = vld [vmem:[#allocation7] sm:$0xf]
    %v128 = vld [vmem:[#allocation7 + $0x4] sm:$0xf]
    %v129 = vld [vmem:[#allocation7 + $0x8] sm:$0xf]
    %v130 = vld [vmem:[#allocation7 + $0xc] sm:$0xf]
    %v131 = vld [vmem:[#allocation7 + $0x10] sm:$0xf]
    %v132 = vld [vmem:[#allocation7 + $0x14] sm:$0xf]
    %v133 = vld [vmem:[#allocation7 + $0x18] sm:$0xf]
    %v134 = vld [vmem:[#allocation7 + $0x1c] sm:$0xf]
    %v135 = vld [vmem:[#allocation7 + $0x20] sm:$0xf]
    %v136 = vld [vmem:[#allocation7 + $0x24] sm:$0xf]
    %v137 = vld [vmem:[#allocation7 + $0x28] sm:$0xf]
    %v138 = vld [vmem:[#allocation7 + $0x2c] sm:$0xf]
    %v139 = vld [vmem:[#allocation7 + $0x30] sm:$0xf]
    %v140 = vld [vmem:[#allocation7 + $0x34] sm:$0xf]
    %v141 = vld [vmem:[#allocation7 + $0x38] sm:$0xf]
    %v142 = vld [vmem:[#allocation7 + $0x3c] sm:$0xf]
    %v143 = vld [vmem:[%s4] sm:$0x1]
    %v145 = vperm.slane %v143, 0
    %v163 = vunpack.c.l.b16 %v127
    %v164 = vunpack.c.l.b16 %v128
    %v165 = vunpack.c.l.b16 %v129
    %v166 = vunpack.c.l.b16 %v130
    %v167 = vunpack.c.l.b16 %v131
    %v168 = vunpack.c.l.b16 %v132
    %v169 = vunpack.c.l.b16 %v133
    %v170 = vunpack.c.l.b16 %v134
    %v171 = vunpack.c.l.b16 %v135
    %v172 = vunpack.c.l.b16 %v136
    %v173 = vunpack.c.l.b16 %v137
    %v174 = vunpack.c.l.b16 %v138
    %v175 = vunpack.c.l.b16 %v139
    %v176 = vunpack.c.l.b16 %v140
    %v177 = vunpack.c.l.b16 %v141
    %v178 = vunpack.c.l.b16 %v142
    %v179 = vpack.c.b16 %v164, %v163
    %v180 = vpack.c.b16 %v166, %v165
    %v181 = vpack.c.b16 %v168, %v167
    %v182 = vpack.c.b16 %v170, %v169
    %v183 = vpack.c.b16 %v172, %v171
    %v184 = vpack.c.b16 %v174, %v173
    %v185 = vpack.c.b16 %v176, %v175
    %v186 = vpack.c.b16 %v178, %v177
    %195 = vmatpush.bf16.msra.mxu0 %v186
    %196 = vmatpush.bf16.msra.mxu0 %v185
    %197 = vmatpush.bf16.msra.mxu0 %v184
    %198 = vmatpush.bf16.msra.mxu0 %v183
    %199 = vmatpush.bf16.msra.mxu0 %v182
    %200 = vmatpush.bf16.msra.mxu0 %v181
    %201 = vmatpush.bf16.msra.mxu0 %v180
    %202 = vmatpush.bf16.msra.mxu0 %v179
    %203 = vmatmul.bf16.gmra.mxu0 %v126
    %v204 = vpop.f32.mrf.mxu0
    %v205 = vadd.f32 %v145, %v204
    %v206 = vpop.f32.mrf.mxu0
    %v207 = vadd.f32 %v145, %v206
    %208 = vdwg.mxu0
    %v209 = vmax.f32 %v205, 0.0
    %v210 = vmax.f32 %v207, 0.0
    %v211 = vpack.c.bf16 %v210, %v209
    %v212 = vld [vmem:[#allocation8] sm:$0xf]
    %v213 = vld [vmem:[#allocation8 + $0x4] sm:$0xf]
    %v214 = vld [vmem:[#allocation8 + $0x8] sm:$0xf]
    %v215 = vld [vmem:[#allocation8 + $0xc] sm:$0xf]
    %v216 = vld [vmem:[#allocation8 + $0x10] sm:$0xf]
    %v217 = vld [vmem:[#allocation8 + $0x14] sm:$0xf]
    %v218 = vld [vmem:[#allocation8 + $0x18] sm:$0xf]
    %v219 = vld [vmem:[#allocation8 + $0x1c] sm:$0xf]
    %v220 = vld [vmem:[#allocation8 + $0x20] sm:$0xf]
    %v221 = vld [vmem:[#allocation8 + $0x24] sm:$0xf]
    %v222 = vld [vmem:[#allocation8 + $0x28] sm:$0xf]
    %v223 = vld [vmem:[#allocation8 + $0x2c] sm:$0xf]
    %v224 = vld [vmem:[#allocation8 + $0x30] sm:$0xf]
    %v225 = vld [vmem:[#allocation8 + $0x34] sm:$0xf]
    %v226 = vld [vmem:[#allocation8 + $0x38] sm:$0xf]
    %v227 = vld [vmem:[#allocation8 + $0x3c] sm:$0xf]
    %v228 = vld [vmem:[%s6] sm:$0x1]
    %v230 = vperm.slane %v228, 0
    %v248 = vunpack.c.l.b16 %v212
    %v249 = vunpack.c.l.b16 %v213
    %v250 = vunpack.c.l.b16 %v214
    %v251 = vunpack.c.l.b16 %v215
    %v252 = vunpack.c.l.b16 %v216
    %v253 = vunpack.c.l.b16 %v217
    %v254 = vunpack.c.l.b16 %v218
    %v255 = vunpack.c.l.b16 %v219
    %v256 = vunpack.c.l.b16 %v220
    %v257 = vunpack.c.l.b16 %v221
    %v258 = vunpack.c.l.b16 %v222
    %v259 = vunpack.c.l.b16 %v223
    %v260 = vunpack.c.l.b16 %v224
    %v261 = vunpack.c.l.b16 %v225
    %v262 = vunpack.c.l.b16 %v226
    %v263 = vunpack.c.l.b16 %v227
    %v264 = vpack.c.b16 %v249, %v248
    %v265 = vpack.c.b16 %v251, %v250
    %v266 = vpack.c.b16 %v253, %v252
    %v267 = vpack.c.b16 %v255, %v254
    %v268 = vpack.c.b16 %v257, %v256
    %v269 = vpack.c.b16 %v259, %v258
    %v270 = vpack.c.b16 %v261, %v260
    %v271 = vpack.c.b16 %v263, %v262
    %280 = vmatpush.bf16.msra.mxu0 %v271
    %281 = vmatpush.bf16.msra.mxu0 %v270
    %282 = vmatpush.bf16.msra.mxu0 %v269
    %283 = vmatpush.bf16.msra.mxu0 %v268
    %284 = vmatpush.bf16.msra.mxu0 %v267
    %285 = vmatpush.bf16.msra.mxu0 %v266
    %286 = vmatpush.bf16.msra.mxu0 %v265
    %287 = vmatpush.bf16.msra.mxu0 %v264
    %288 = vmatmul.bf16.gmra.mxu0 %v211
    %v289 = vpop.f32.mrf.mxu0
    %v290 = vadd.f32 %v230, %v289
    %v291 = vpop.f32.mrf.mxu0
    %v292 = vadd.f32 %v230, %v291
    %293 = vdwg.mxu0
    %v294 = vtanh.pop %v290
    %v295 = vtanh.pop %v292
    %v298 = vrot.slane %v294, 2
    %v299 = vrot.slane %v294, 4
    %v300 = vrot.slane %v294, 6
    %v301 = vrot.slane %v295, 2
    %v302 = vrot.slane %v295, 4
    %v303 = vrot.slane %v295, 6
    %vm310 = vcmask 1041408
    %v311 = vsel %vm310, %v294, -inf
    %v312 = vrot.slane %v311, 4
    %v313 = vmax.f32 %v311, %v312
    %v314 = vrot.slane %v313, 2
    %v315 = vmax.f32 %v313, %v314
    %v316 = vrot.slane %v315, 1
    %v317 = vmax.f32 %v315, %v316
    %v318 = vsel %vm310, %v298, -inf
    %v319 = vrot.slane %v318, 4
    %v320 = vmax.f32 %v318, %v319
    %v321 = vrot.slane %v320, 2
    %v322 = vmax.f32 %v320, %v321
    %v323 = vrot.slane %v322, 1
    %v324 = vmax.f32 %v322, %v323
    %v325 = vsel %vm310, %v299, -inf
    %v326 = vrot.slane %v325, 4
    %v327 = vmax.f32 %v325, %v326
    %v328 = vrot.slane %v327, 2
    %v329 = vmax.f32 %v327, %v328
    %v330 = vrot.slane %v329, 1
    %v331 = vmax.f32 %v329, %v330
    %v332 = vsel %vm310, %v300, -inf
    %v333 = vrot.slane %v332, 4
    %v334 = vmax.f32 %v332, %v333
    %v335 = vrot.slane %v334, 2
    %v336 = vmax.f32 %v334, %v335
    %v337 = vrot.slane %v336, 1
    %v338 = vmax.f32 %v336, %v337
    %v339 = vsel %vm310, %v295, -inf
    %v340 = vrot.slane %v339, 4
    %v341 = vmax.f32 %v339, %v340
    %v342 = vrot.slane %v341, 2
    %v343 = vmax.f32 %v341, %v342
    %v344 = vrot.slane %v343, 1
    %v345 = vmax.f32 %v343, %v344
    %v346 = vsel %vm310, %v301, -inf
    %v347 = vrot.slane %v346, 4
    %v348 = vmax.f32 %v346, %v347
    %v349 = vrot.slane %v348, 2
    %v350 = vmax.f32 %v348, %v349
    %v351 = vrot.slane %v350, 1
    %v352 = vmax.f32 %v350, %v351
    %v353 = vsel %vm310, %v302, -inf
    %v354 = vrot.slane %v353, 4
    %v355 = vmax.f32 %v353, %v354
    %v356 = vrot.slane %v355, 2
    %v357 = vmax.f32 %v355, %v356
    %v358 = vrot.slane %v357, 1
    %v359 = vmax.f32 %v357, %v358
    %v360 = vsel %vm310, %v303, -inf
    %v361 = vrot.slane %v360, 4
    %v362 = vmax.f32 %v360, %v361
    %v363 = vrot.slane %v362, 2
    %v364 = vmax.f32 %v362, %v363
    %v365 = vrot.slane %v364, 1
    %v366 = vmax.f32 %v364, %v365
    %v367 = vsub.f32 %v294, %v317
    %v368 = vsub.f32 %v298, %v324
    %v369 = vsub.f32 %v299, %v331
    %v370 = vsub.f32 %v300, %v338
    %v371 = vsub.f32 %v295, %v345
    %v372 = vsub.f32 %v301, %v352
    %v373 = vsub.f32 %v302, %v359
    %v374 = vsub.f32 %v303, %v366
    %v375 = vmul.f32 %v367, 1.442695
    %v376 = vpow.pop %v375
    %v377 = vmul.f32 %v368, 1.442695
    %v378 = vpow.pop %v377
    %v379 = vmul.f32 %v369, 1.442695
    %v380 = vpow.pop %v379
    %v381 = vmul.f32 %v370, 1.442695
    %v382 = vpow.pop %v381
    %v383 = vmul.f32 %v371, 1.442695
    %v384 = vpow.pop %v383
    %v385 = vmul.f32 %v372, 1.442695
    %v386 = vpow.pop %v385
    %v387 = vmul.f32 %v373, 1.442695
    %v388 = vpow.pop %v387
    %v389 = vmul.f32 %v374, 1.442695
    %v390 = vpow.pop %v389
    %v391 = vsel %vm310, %v376, 0.0
    %v392 = vrot.slane %v391, 4
    %v393 = vadd.f32 %v391, %v392
    %v394 = vrot.slane %v393, 2
    %v395 = vadd.f32 %v393, %v394
    %v396 = vrot.slane %v395, 1
    %v397 = vadd.f32 %v395, %v396
    %v398 = vsel %vm310, %v378, 0.0
    %v399 = vrot.slane %v398, 4
    %v400 = vadd.f32 %v398, %v399
    %v401 = vrot.slane %v400, 2
    %v402 = vadd.f32 %v400, %v401
    %v403 = vrot.slane %v402, 1
    %v404 = vadd.f32 %v402, %v403
    %v405 = vsel %vm310, %v380, 0.0
    %v406 = vrot.slane %v405, 4
    %v407 = vadd.f32 %v405, %v406
    %v408 = vrot.slane %v407, 2
    %v409 = vadd.f32 %v407, %v408
    %v410 = vrot.slane %v409, 1
    %v411 = vadd.f32 %v409, %v410
    %v412 = vsel %vm310, %v382, 0.0
    %v413 = vrot.slane %v412, 4
    %v414 = vadd.f32 %v412, %v413
    %v415 = vrot.slane %v414, 2
    %v416 = vadd.f32 %v414, %v415
    %v417 = vrot.slane %v416, 1
    %v418 = vadd.f32 %v416, %v417
    %v419 = vsel %vm310, %v384, 0.0
    %v420 = vrot.slane %v419, 4
    %v421 = vadd.f32 %v419, %v420
    %v422 = vrot.slane %v421, 2
    %v423 = vadd.f32 %v421, %v422
    %v424 = vrot.slane %v423, 1
    %v425 = vadd.f32 %v423, %v424
    %v426 = vsel %vm310, %v386, 0.0
    %v427 = vrot.slane %v426, 4
    %v428 = vadd.f32 %v426, %v427
    %v429 = vrot.slane %v428, 2
    %v430 = vadd.f32 %v428, %v429
    %v431 = vrot.slane %v430, 1
    %v432 = vadd.f32 %v430, %v431
    %v433 = vsel %vm310, %v388, 0.0
    %v434 = vrot.slane %v433, 4
    %v435 = vadd.f32 %v433, %v434
    %v436 = vrot.slane %v435, 2
    %v437 = vadd.f32 %v435, %v436
    %v438 = vrot.slane %v437, 1
    %v439 = vadd.f32 %v437, %v438
    %v440 = vsel %vm310, %v390, 0.0
    %v441 = vrot.slane %v440, 4
    %v442 = vadd.f32 %v440, %v441
    %v443 = vrot.slane %v442, 2
    %v444 = vadd.f32 %v442, %v443
    %v445 = vrot.slane %v444, 1
    %v446 = vadd.f32 %v444, %v445
    %v447 = vrcp.pop %v397
    %v448 = vmul.f32 %v397, %v447
    %v449 = vsub.f32 1.0, %v448
    %v450 = vmul.f32 %v447, %v449
    %v451 = vadd.f32 %v447, %v450
    %vm452 = vweird.f32 %v397
    %vm453 = vweird.f32 %v447
    %vm454 = vmor %vm452, %vm453
    %v455 = vsel %vm454, %v447, %v451
    %v456 = vand.u32 2147483647, %v397
    %vm457 = vcmp.eq.f32.partialorder %v456, 8.507059e+37
    %v458 = vand.u32 %v397, 2147483648
    %v459 = vor.u32 1.1754944e-38, %v458
    %v460 = vsel %vm457, %v459, %v455
    %v461 = vmul.f32 %v376, %v460
    %v462 = vrcp.pop %v404
    %v463 = vmul.f32 %v404, %v462
    %v464 = vsub.f32 1.0, %v463
    %v465 = vmul.f32 %v462, %v464
    %v466 = vadd.f32 %v462, %v465
    %vm467 = vweird.f32 %v404
    %vm468 = vweird.f32 %v462
    %vm469 = vmor %vm467, %vm468
    %v470 = vsel %vm469, %v462, %v466
    %v471 = vand.u32 2147483647, %v404
    %vm472 = vcmp.eq.f32.partialorder %v471, 8.507059e+37
    %v473 = vand.u32 %v404, 2147483648
    %v474 = vor.u32 1.1754944e-38, %v473
    %v475 = vsel %vm472, %v474, %v470
    %v476 = vmul.f32 %v378, %v475
    %v477 = vrcp.pop %v411
    %v478 = vmul.f32 %v411, %v477
    %v479 = vsub.f32 1.0, %v478
    %v480 = vmul.f32 %v477, %v479
    %v481 = vadd.f32 %v477, %v480
    %vm482 = vweird.f32 %v411
    %vm483 = vweird.f32 %v477
    %vm484 = vmor %vm482, %vm483
    %v485 = vsel %vm484, %v477, %v481
    %v486 = vand.u32 2147483647, %v411
    %vm487 = vcmp.eq.f32.partialorder %v486, 8.507059e+37
    %v488 = vand.u32 %v411, 2147483648
    %v489 = vor.u32 1.1754944e-38, %v488
    %v490 = vsel %vm487, %v489, %v485
    %v491 = vmul.f32 %v380, %v490
    %v492 = vrcp.pop %v418
    %v493 = vmul.f32 %v418, %v492
    %v494 = vsub.f32 1.0, %v493
    %v495 = vmul.f32 %v492, %v494
    %v496 = vadd.f32 %v492, %v495
    %vm497 = vweird.f32 %v418
    %vm498 = vweird.f32 %v492
    %vm499 = vmor %vm497, %vm498
    %v500 = vsel %vm499, %v492, %v496
    %v501 = vand.u32 2147483647, %v418
    %vm502 = vcmp.eq.f32.partialorder %v501, 8.507059e+37
    %v503 = vand.u32 %v418, 2147483648
    %v504 = vor.u32 1.1754944e-38, %v503
    %v505 = vsel %vm502, %v504, %v500
    %v506 = vmul.f32 %v382, %v505
    %v507 = vrcp.pop %v425
    %v508 = vmul.f32 %v425, %v507
    %v509 = vsub.f32 1.0, %v508
    %v510 = vmul.f32 %v507, %v509
    %v511 = vadd.f32 %v507, %v510
    %vm512 = vweird.f32 %v425
    %vm513 = vweird.f32 %v507
    %vm514 = vmor %vm512, %vm513
    %v515 = vsel %vm514, %v507, %v511
    %v516 = vand.u32 2147483647, %v425
    %vm517 = vcmp.eq.f32.partialorder %v516, 8.507059e+37
    %v518 = vand.u32 %v425, 2147483648
    %v519 = vor.u32 1.1754944e-38, %v518
    %v520 = vsel %vm517, %v519, %v515
    %v521 = vmul.f32 %v384, %v520
    %v522 = vrcp.pop %v432
    %v523 = vmul.f32 %v432, %v522
    %v524 = vsub.f32 1.0, %v523
    %v525 = vmul.f32 %v522, %v524
    %v526 = vadd.f32 %v522, %v525
    %vm527 = vweird.f32 %v432
    %vm528 = vweird.f32 %v522
    %vm529 = vmor %vm527, %vm528
    %v530 = vsel %vm529, %v522, %v526
    %v531 = vand.u32 2147483647, %v432
    %vm532 = vcmp.eq.f32.partialorder %v531, 8.507059e+37
    %v533 = vand.u32 %v432, 2147483648
    %v534 = vor.u32 1.1754944e-38, %v533
    %v535 = vsel %vm532, %v534, %v530
    %v536 = vmul.f32 %v386, %v535
    %v537 = vrcp.pop %v439
    %v538 = vmul.f32 %v439, %v537
    %v539 = vsub.f32 1.0, %v538
    %v540 = vmul.f32 %v537, %v539
    %v541 = vadd.f32 %v537, %v540
    %vm542 = vweird.f32 %v439
    %vm543 = vweird.f32 %v537
    %vm544 = vmor %vm542, %vm543
    %v545 = vsel %vm544, %v537, %v541
    %v546 = vand.u32 2147483647, %v439
    %vm547 = vcmp.eq.f32.partialorder %v546, 8.507059e+37
    %v548 = vand.u32 %v439, 2147483648
    %v549 = vor.u32 1.1754944e-38, %v548
    %v550 = vsel %vm547, %v549, %v545
    %v551 = vmul.f32 %v388, %v550
    %v552 = vrcp.pop %v446
    %v553 = vmul.f32 %v446, %v552
    %v554 = vsub.f32 1.0, %v553
    %v555 = vmul.f32 %v552, %v554
    %v556 = vadd.f32 %v552, %v555
    %vm557 = vweird.f32 %v446
    %vm558 = vweird.f32 %v552
    %vm559 = vmor %vm557, %vm558
    %v560 = vsel %vm559, %v552, %v556
    %v561 = vand.u32 2147483647, %v446
    %vm562 = vcmp.eq.f32.partialorder %v561, 8.507059e+37
    %v563 = vand.u32 %v446, 2147483648
    %v564 = vor.u32 1.1754944e-38, %v563
    %v565 = vsel %vm562, %v564, %v560
    %v566 = vmul.f32 %v390, %v565
    %575 = vst [vmem:[#allocation1] ss:$4 sm:$0xff] %v461
    %s576 = scalar_lea.vmem [#allocation1], 1
    %577 = vst [vmem:[%s576] ss:$4 sm:$0xff] %v476
    %s578 = scalar_lea.vmem [#allocation1], 2
    %579 = vst [vmem:[%s578] ss:$4 sm:$0xff] %v491
    %s580 = scalar_lea.vmem [#allocation1], 3
    %581 = vst [vmem:[%s580] ss:$4 sm:$0xff] %v506
    %s582 = scalar_lea.vmem [#allocation1], 32
    %583 = vst [vmem:[%s582] ss:$4 sm:$0xff] %v521
    %s584 = scalar_lea.vmem [#allocation1], 33
    %585 = vst [vmem:[%s584] ss:$4 sm:$0xff] %v536
    %s586 = scalar_lea.vmem [#allocation1], 34
    %587 = vst [vmem:[%s586] ss:$4 sm:$0xff] %v551
    %s588 = scalar_lea.vmem [#allocation1], 35
    %589 = vst [vmem:[%s588] ss:$4 sm:$0xff] %v566
    %v590 = vld.sshfl [vmem:[#allocation1] sm:$0xff pattern:$0x73625140]
    %v591 = vld.sshfl [vmem:[#allocation1 + $0x20] sm:$0xff pattern:$0x73625140]
    %594 = vst [vmem:[#allocation10] sm:$0xff] %v590
    %595 = vst [vmem:[#allocation10 + $0x8] sm:$0xff] %v591
    // Predicated region
    $region46: #{tpu_custom_call.1} parent=1 // pred_check
      _
    $region47: #{tpu_custom_call.1} parent=1 // pred_check_branch
      %597 = sbr.rel (0) target = $region49
    $region48: #{tpu_custom_call.1} parent=1 // pred_region
      %599 = vsyncadd [#allocation4], 0
      %s600 = sshll.u32 [#allocation10], 4
      %s601 = int_to_ptr.vmem [resolvable:$true] %s600
      %s602 = sshll.u32 %s7, 4
      %s603 = int_to_ptr.hbm [resolvable:$true] %s602
      %608 = dma.vmem_to_hbm [thread:$0]  %s601, 256, %s603, [#allocation4], 128, 128, 8
    $region49: #{tpu_custom_call.1} parent=1 // pred_fallthru
      _
    // Predicated region
    $region50: #{tpu_custom_call.1} parent=1 // pred_check
      _
    $region51: #{tpu_custom_call.1} parent=1 // pred_check_branch
      %610 = sbr.rel (0) target = $region53
    $region52: #{tpu_custom_call.1} parent=1 // pred_region
      %612 = dma.done [#allocation4], 256
    $region53: #{tpu_custom_call.1} parent=1 // pred_fallthru
      _
    %613 = vsyncpa [#allocation3], 1
    %614 = vsyncpa [#allocation6], 1
    %615 = vsyncpa [#allocation9], 1
    %616 = vsyncpa [#allocation4], 1

</llo_original>
